<compile_context>
chip_gen: v6e
topology: v6e:2x2x1
jax: 0.10.0
libtpu: 0.0.40
codegen_flags: <defaults>
</compile_context>

<pallas_src>
import functools

import jax
import jax.numpy as jnp
from jax.experimental import pallas as pl
from jax.experimental.pallas import tpu as pltpu

_LANES = 128
_SUBLANES = 8
_GROUP_ROWS = 256                        # inner-loop chunk: (256, 128) f32 = 128 KiB
_TARGET_BLOCK_BYTES = 4 * 1024 * 1024    # per-operand HBM tile per grid step
_VMEM_LIMIT_BYTES = 32 * 1024 * 1024     # safe on v5e/v6e (128 MiB) and v7x (64 MiB)


def _round_up(v, m):
    return ((v + m - 1) // m) * m


def _num_tensorcores():
    """TensorCores per chip (2 on v7x, 1 on v5e/v6e).  Defensive: default 1."""
    try:
        info = pltpu.get_tpu_info()
        for attr in ("num_cores", "core_count", "num_tensorcores", "tensorcore_count"):
            v = getattr(info, attr, None)
            if v:
                return max(1, int(v))
    except Exception:
        pass
    try:
        kind = jax.devices()[0].device_kind.lower()
        if "v7" in kind:
            return 2
    except Exception:
        pass
    return 1


def _as_kernel_dtype(a):
    """Keep narrow dtypes native (cast to f32 happens in-register in-kernel)."""
    d = a.dtype
    if d == jnp.bool_:
        return a.astype(jnp.int8)        # stays a 1-byte stream
    for k in (jnp.float32, jnp.bfloat16, jnp.int8, jnp.uint8, jnp.int32):
        if d == k:
            return a
    return a.astype(jnp.float32)         # f64 (no TPU f64), f16, other widths


def _dice_kernel(x_ref, t_ref, inter_ref, union_ref, *,
                 block_rows, total_rows, group_rows):
    c = pl.program_id(0)                  # parallel slice (TensorCore on v7x)
    j = pl.program_id(1)                  # reduction step within the slice
    steps_per_core = pl.num_programs(1)

    # Zero this slice's partial accumulators at the start of its sweep.
    @pl.when(j == 0)
    def _():
        inter_ref[...] = jnp.zeros_like(inter_ref)
        union_ref[...] = jnp.zeros_like(union_ref)

    block_idx = c * steps_per_core + j    # logical (unclamped) block index
    rows_left = total_rows - block_idx * block_rows

    n_groups = block_rows // group_rows
    sub = group_rows // _SUBLANES
    zeros = jnp.zeros((_SUBLANES, _LANES), jnp.float32)

    def load_group(g):
        start = pl.multiple_of(g * group_rows, group_rows)
        xv = x_ref[pl.ds(start, group_rows), :].astype(jnp.float32)
        tv = t_ref[pl.ds(start, group_rows), :].astype(jnp.float32)
        return xv, tv

    def fold(xv, tv, carry):
        # Pure VPU work: fold a (group_rows, 128) chunk into (8, 128) carries
        # via leading-axis adds (no XLU reduce inside the kernel).
        inter_acc, union_acc = carry
        prod = (xv * tv).reshape(sub, _SUBLANES, _LANES)
        inter_acc = inter_acc + jnp.sum(prod, axis=0)
        ssum = (xv + tv).reshape(sub, _SUBLANES, _LANES)
        union_acc = union_acc + jnp.sum(ssum, axis=0)
        return inter_acc, union_acc

    def full_body(g, carry):
        xv, tv = load_group(g)
        return fold(xv, tv, carry)

    def masked_body(g, carry):
        # Ragged tail (or fully-clamped duplicate) block: rows at or beyond
        # `rows_left` hold unspecified data and must not touch the sums.
        xv, tv = load_group(g)
        valid = rows_left - g * group_rows
        ridx = jax.lax.broadcasted_iota(jnp.int32, (group_rows, _LANES), 0)
        keep = ridx < valid
        return fold(jnp.where(keep, xv, 0.0), jnp.where(keep, tv, 0.0), carry)

    def flush(carry):
        inter_acc, union_acc = carry
        inter_ref[...] += inter_acc[jnp.newaxis]
        union_ref[...] += union_acc[jnp.newaxis]

    @pl.when(rows_left >= block_rows)      # common case: fully valid block
    def _():
        flush(jax.lax.fori_loop(0, n_groups, full_body, (zeros, zeros)))

    @pl.when(rows_left < block_rows)       # tail / clamped duplicate block
    def _():
        flush(jax.lax.fori_loop(0, n_groups, masked_body, (zeros, zeros)))


def dice_loss(inputs, targets, smooth=1.0):
    """Pallas TPU implementation of DiceLoss.forward."""
    assert inputs.shape == targets.shape, "inputs/targets must match in shape"
    smooth = jnp.float32(smooth)

    x = _as_kernel_dtype(jnp.ravel(inputs))
    t = _as_kernel_dtype(jnp.ravel(targets))
    n = x.shape[0]
    if n == 0:
        # inter = union = 0  ->  dice = smooth / smooth = 1  ->  loss = 0
        return jnp.asarray(0.0, dtype=jnp.float32)

    rows = n // _LANES                    # full 128-wide rows go to the kernel
    n_k = rows * _LANES

    inter = jnp.float32(0.0)
    union = jnp.float32(0.0)

    if rows > 0:
        x2 = x[:n_k].reshape(rows, _LANES)     # free reshape when n % 128 == 0
        t2 = t[:n_k].reshape(rows, _LANES)

        max_item = max(x.dtype.itemsize, t.dtype.itemsize)
        cap_rows = (_TARGET_BLOCK_BYTES // (_LANES * max_item)
                    ) // _GROUP_ROWS * _GROUP_ROWS
        block_rows = min(cap_rows, _round_up(rows, _GROUP_ROWS))
        n_blocks = -(-rows // block_rows)

        # Shard the reduction across TensorCores only where that exists (v7x).
        n_splits = 2 if (_num_tensorcores() >= 2 and n_blocks >= 2) else 1
        steps_per_core = -(-n_blocks // n_splits)

        def in_index_map(c, j):
            # Clamp so an out-of-range logical block still maps to a legal DMA;
            # its contribution is fully row-masked inside the kernel.
            return (jnp.minimum(c * steps_per_core + j, n_blocks - 1), 0)

        kernel = functools.partial(_dice_kernel, block_rows=block_rows,
                                   total_rows=rows, group_rows=_GROUP_ROWS)

        acc_shape = jax.ShapeDtypeStruct((n_splits, _SUBLANES, _LANES), jnp.float32)
        cost = pl.CostEstimate(
            flops=4 * n_k,
            transcendentals=0,
            bytes_accessed=n_k * (x.dtype.itemsize + t.dtype.itemsize)
            + 2 * n_splits * _SUBLANES * _LANES * 4,
        )

        inter_parts, union_parts = pl.pallas_call(
            kernel,
            out_shape=(acc_shape, acc_shape),
            grid_spec=pltpu.PrefetchScalarGridSpec(
                num_scalar_prefetch=0,
                grid=(n_splits, steps_per_core),
                in_specs=[
                    pl.BlockSpec((block_rows, _LANES), in_index_map),
                    pl.BlockSpec((block_rows, _LANES), in_index_map),
                ],
                out_specs=[
                    pl.BlockSpec((1, _SUBLANES, _LANES), lambda c, j: (c, 0, 0)),
                    pl.BlockSpec((1, _SUBLANES, _LANES), lambda c, j: (c, 0, 0)),
                ],
            ),
            compiler_params=pltpu.CompilerParams(
                dimension_semantics=("parallel", "arbitrary"),
                vmem_limit_bytes=_VMEM_LIMIT_BYTES,
            ),
            cost_estimate=cost,
        )(x2, t2)

        inter = inter + jnp.sum(inter_parts)
        union = union + jnp.sum(union_parts)

    if n_k < n:
        # < 128 leftover elements: fold them in with a tiny jnp reduction
        # instead of materializing padded copies of both arrays.
        xt = x[n_k:].astype(jnp.float32)
        tt = t[n_k:].astype(jnp.float32)
        inter = inter + jnp.sum(xt * tt)
        union = union + jnp.sum(xt) + jnp.sum(tt)

    dice = (2.0 * inter + smooth) / (union + smooth)
    return 1.0 - dice


def _dice_loss_ref(inputs, targets, smooth=1.0):
    inputs = inputs.astype(jnp.float32)
    targets = targets.astype(jnp.float32)
    inter = jnp.sum(inputs * targets)
    union = jnp.sum(inputs) + jnp.sum(targets)
    dice = (2.0 * inter + smooth) / (union + smooth)
    return 1.0 - dice


if __name__ == "__main__":
    key = jax.random.PRNGKey(0)
    ks = jax.random.split(key, 8)

    # 1) Typical segmentation-style shape (batch, channels, H, W): single block.
    x1 = jax.nn.sigmoid(jax.random.normal(ks[0], (2, 4, 16, 16), jnp.float32))
    t1 = (jax.random.uniform(ks[1], (2, 4, 16, 16)) > 0.5).astype(jnp.float32)
    l1 = jax.block_until_ready(dice_loss(x1, t1, smooth=1.0))
    r1 = _dice_loss_ref(x1, t1, smooth=1.0)
    assert jnp.allclose(l1, r1, rtol=1e-5, atol=1e-5), (l1, r1)

    # 2) Medium case: multiple 8192-row blocks + row-masked tail block
    #    (and the 2-way TensorCore split on v7x).  1,105,920 elems = 8640 rows.
    x2 = jax.nn.sigmoid(jax.random.normal(ks[2], (2, 3, 512, 360), jnp.float32))
    t2 = (jax.random.uniform(ks[3], (2, 3, 512, 360)) > 0.5).astype(jnp.float32)
    l2 = jax.block_until_ready(dice_loss(x2, t2, smooth=1.0))
    r2 = _dice_loss_ref(x2, t2, smooth=1.0)
    assert jnp.allclose(l2, r2, rtol=1e-4, atol=1e-5), (l2, r2)

    # 3) Tiny shape whose numel is not a multiple of 128: exercises the
    #    pad-free wrapper remainder path (kernel sees the 1152-elem prefix).
    x3 = jax.nn.sigmoid(jax.random.normal(ks[4], (3, 5, 7, 11), jnp.float32))
    t3 = (jax.random.uniform(ks[5], (3, 5, 7, 11)) > 0.5).astype(jnp.float32)
    l3 = jax.block_until_ready(dice_loss(x3, t3, smooth=1.0))
    r3 = _dice_loss_ref(x3, t3, smooth=1.0)
    assert jnp.allclose(l3, r3, rtol=1e-5, atol=1e-5), (l3, r3)

    # 4) Native narrow dtypes streamed straight into the kernel:
    #    bf16 activations + int8 mask, f32 accumulation in-register.
    x4 = jax.nn.sigmoid(
        jax.random.normal(ks[6], (2, 4, 64, 64), jnp.float32)).astype(jnp.bfloat16)
    t4 = (jax.random.uniform(ks[7], (2, 4, 64, 64)) > 0.5).astype(jnp.int8)
    l4 = jax.block_until_ready(dice_loss(x4, t4, smooth=1.0))
    r4 = _dice_loss_ref(x4, t4, smooth=1.0)
    assert jnp.allclose(l4, r4, rtol=1e-4, atol=1e-5), (l4, r4)

    print("KERNEL_OK")
</pallas_src>

<mosaic_0001>
module attributes {stable_mosaic.version = 11 : i64} {
  func.func @_dice_kernel(%arg0: i32, %arg1: i32, %arg2: memref<256x128xf32, #tpu.memory_space<vmem>>, %arg3: memref<256x128xf32, #tpu.memory_space<vmem>>, %arg4: memref<1x8x128xf32, #tpu.memory_space<vmem>>, %arg5: memref<1x8x128xf32, #tpu.memory_space<vmem>>) attributes {dimension_semantics = [#tpu.dimension_semantics<parallel>, #tpu.dimension_semantics<arbitrary>], iteration_bounds = array<i64: 1, 1>, scalar_prefetch = 0 : i64, scratch_operands = 0 : i64, tpu.core_type = #tpu.core_type<tc>, window_params = [{transform_indices = @transform_0, window_bounds = array<i64: 256, 128>}, {transform_indices = @transform_1, window_bounds = array<i64: 256, 128>}, {transform_indices = @transform_2, window_bounds = array<i64: 1, 8, 128>}, {transform_indices = @transform_3, window_bounds = array<i64: 1, 8, 128>}]} {
    %c0_i32 = arith.constant 0 : i32
    %0 = arith.cmpi eq, %arg1, %c0_i32 : i32
    %1 = arith.extui %0 : i1 to i32
    %c0_i32_0 = arith.constant 0 : i32
    %2 = arith.cmpi ne, %1, %c0_i32_0 : i32
    scf.if %2 {
      %cst_5 = arith.constant 0.000000e+00 : f32
      %14 = vector.broadcast %cst_5 : f32 to vector<1x8x128xf32>
      %c0 = arith.constant 0 : index
      %c0_6 = arith.constant 0 : index
      %c0_7 = arith.constant 0 : index
      %15 = vector.load %arg4[%c0, %c0_6, %c0_7] : memref<1x8x128xf32, #tpu.memory_space<vmem>>, vector<1x8x128xf32>
      tpu.vector_store %arg4[%c0, %c0_6, %c0_7], %14 {strides = array<i32>} : memref<1x8x128xf32, #tpu.memory_space<vmem>>, vector<1x8x128xf32>,
      %cst_8 = arith.constant 0.000000e+00 : f32
      %16 = vector.broadcast %cst_8 : f32 to vector<1x8x128xf32>
      %c0_9 = arith.constant 0 : index
      %c0_10 = arith.constant 0 : index
      %c0_11 = arith.constant 0 : index
      %17 = vector.load %arg5[%c0_9, %c0_10, %c0_11] : memref<1x8x128xf32, #tpu.memory_space<vmem>>, vector<1x8x128xf32>
      tpu.vector_store %arg5[%c0_9, %c0_10, %c0_11], %16 {strides = array<i32>} : memref<1x8x128xf32, #tpu.memory_space<vmem>>, vector<1x8x128xf32>,
    } else {
    }
    %c1_i32 = arith.constant 1 : i32
    %3 = arith.muli %arg0, %c1_i32 : i32
    %4 = arith.addi %3, %arg1 : i32
    %c256_i32 = arith.constant 256 : i32
    %5 = arith.muli %4, %c256_i32 : i32
    %c16_i32 = arith.constant 16 : i32
    %6 = arith.subi %c16_i32, %5 : i32
    %cst = arith.constant 0.000000e+00 : f32
    %7 = vector.broadcast %cst : f32 to vector<8x128xf32>
    %c256_i32_1 = arith.constant 256 : i32
    %8 = arith.cmpi sge, %6, %c256_i32_1 : i32
    %9 = arith.extui %8 : i1 to i32
    %c0_i32_2 = arith.constant 0 : i32
    %10 = arith.cmpi ne, %9, %c0_i32_2 : i32
    scf.if %10 {
      %c0_i32_5 = arith.constant 0 : i32
      %c256_i32_6 = arith.constant 256 : i32
      %14 = arith.muli %c0_i32_5, %c256_i32_6 : i32
      %15 = tpu.assume_multiple %14, 256 : i32
      %16 = arith.index_cast %15 : i32 to index
      %c0 = arith.constant 0 : index
      %17 = vector.load %arg2[%16, %c0] : memref<256x128xf32, #tpu.memory_space<vmem>>, vector<256x128xf32>
      %18 = arith.index_cast %15 : i32 to index
      %c0_7 = arith.constant 0 : index
      %19 = vector.load %arg3[%18, %c0_7] : memref<256x128xf32, #tpu.memory_space<vmem>>, vector<256x128xf32>
      %20 = arith.mulf %17, %19 : vector<256x128xf32>
      %21 = vector.shape_cast %20 : vector<256x128xf32> to vector<32x8x128xf32>
      %cst_8 = arith.constant dense<0.000000e+00> : vector<8x128xf32>
      %22 = vector.multi_reduction <add>, %21, %cst_8 [0] : vector<32x8x128xf32> to vector<8x128xf32>
      %23 = arith.addf %7, %22 : vector<8x128xf32>
      %24 = arith.addf %17, %19 : vector<256x128xf32>
      %25 = vector.shape_cast %24 : vector<256x128xf32> to vector<32x8x128xf32>
      %cst_9 = arith.constant dense<0.000000e+00> : vector<8x128xf32>
      %26 = vector.multi_reduction <add>, %25, %cst_9 [0] : vector<32x8x128xf32> to vector<8x128xf32>
      %27 = arith.addf %7, %26 : vector<8x128xf32>
      %c1_i32_10 = arith.constant 1 : i32
      %c0_11 = arith.constant 0 : index
      %c0_12 = arith.constant 0 : index
      %c0_13 = arith.constant 0 : index
      %28 = vector.load %arg4[%c0_11, %c0_12, %c0_13] : memref<1x8x128xf32, #tpu.memory_space<vmem>>, vector<1x8x128xf32>
      %29 = vector.shape_cast %23 : vector<8x128xf32> to vector<1x8x128xf32>
      %30 = arith.addf %28, %29 : vector<1x8x128xf32>
      %c0_14 = arith.constant 0 : index
      %c0_15 = arith.constant 0 : index
      %c0_16 = arith.constant 0 : index
      %31 = vector.load %arg4[%c0_14, %c0_15, %c0_16] : memref<1x8x128xf32, #tpu.memory_space<vmem>>, vector<1x8x128xf32>
      tpu.vector_store %arg4[%c0_14, %c0_15, %c0_16], %30 {strides = array<i32>} : memref<1x8x128xf32, #tpu.memory_space<vmem>>, vector<1x8x128xf32>,
      %c0_17 = arith.constant 0 : index
      %c0_18 = arith.constant 0 : index
      %c0_19 = arith.constant 0 : index
      %32 = vector.load %arg5[%c0_17, %c0_18, %c0_19] : memref<1x8x128xf32, #tpu.memory_space<vmem>>, vector<1x8x128xf32>
      %33 = vector.shape_cast %27 : vector<8x128xf32> to vector<1x8x128xf32>
      %34 = arith.addf %32, %33 : vector<1x8x128xf32>
      %c0_20 = arith.constant 0 : index
      %c0_21 = arith.constant 0 : index
      %c0_22 = arith.constant 0 : index
      %35 = vector.load %arg5[%c0_20, %c0_21, %c0_22] : memref<1x8x128xf32, #tpu.memory_space<vmem>>, vector<1x8x128xf32>
      tpu.vector_store %arg5[%c0_20, %c0_21, %c0_22], %34 {strides = array<i32>} : memref<1x8x128xf32, #tpu.memory_space<vmem>>, vector<1x8x128xf32>,
    } else {
    }
    %c256_i32_3 = arith.constant 256 : i32
    %11 = arith.cmpi slt, %6, %c256_i32_3 : i32
    %12 = arith.extui %11 : i1 to i32
    %c0_i32_4 = arith.constant 0 : i32
    %13 = arith.cmpi ne, %12, %c0_i32_4 : i32
    scf.if %13 {
      %c0_i32_5 = arith.constant 0 : i32
      %c256_i32_6 = arith.constant 256 : i32
      %14 = arith.muli %c0_i32_5, %c256_i32_6 : i32
      %15 = tpu.assume_multiple %14, 256 : i32
      %16 = arith.index_cast %15 : i32 to index
      %c0 = arith.constant 0 : index
      %17 = vector.load %arg2[%16, %c0] : memref<256x128xf32, #tpu.memory_space<vmem>>, vector<256x128xf32>
      %18 = arith.index_cast %15 : i32 to index
      %c0_7 = arith.constant 0 : index
      %19 = vector.load %arg3[%18, %c0_7] : memref<256x128xf32, #tpu.memory_space<vmem>>, vector<256x128xf32>
      %c256_i32_8 = arith.constant 256 : i32
      %20 = arith.muli %c0_i32_5, %c256_i32_8 : i32
      %21 = arith.subi %6, %20 : i32
      %22 = tpu.iota {dimensions = array<i32: 0>} : vector<256x128xi32>
      %23 = vector.broadcast %21 : i32 to vector<256x128xi32>
      %24 = arith.cmpi slt, %22, %23 : vector<256x128xi32>
      %cst_9 = arith.constant 0.000000e+00 : f32
      %25 = vector.broadcast %cst_9 : f32 to vector<256x128xf32>
      %26 = arith.select %24, %17, %25 : vector<256x128xi1>, vector<256x128xf32>
      %cst_10 = arith.constant 0.000000e+00 : f32
      %27 = vector.broadcast %cst_10 : f32 to vector<256x128xf32>
      %28 = arith.select %24, %19, %27 : vector<256x128xi1>, vector<256x128xf32>
      %29 = arith.mulf %26, %28 : vector<256x128xf32>
      %30 = vector.shape_cast %29 : vector<256x128xf32> to vector<32x8x128xf32>
      %cst_11 = arith.constant dense<0.000000e+00> : vector<8x128xf32>
      %31 = vector.multi_reduction <add>, %30, %cst_11 [0] : vector<32x8x128xf32> to vector<8x128xf32>
      %32 = arith.addf %7, %31 : vector<8x128xf32>
      %33 = arith.addf %26, %28 : vector<256x128xf32>
      %34 = vector.shape_cast %33 : vector<256x128xf32> to vector<32x8x128xf32>
      %cst_12 = arith.constant dense<0.000000e+00> : vector<8x128xf32>
      %35 = vector.multi_reduction <add>, %34, %cst_12 [0] : vector<32x8x128xf32> to vector<8x128xf32>
      %36 = arith.addf %7, %35 : vector<8x128xf32>
      %c1_i32_13 = arith.constant 1 : i32
      %c0_14 = arith.constant 0 : index
      %c0_15 = arith.constant 0 : index
      %c0_16 = arith.constant 0 : index
      %37 = vector.load %arg4[%c0_14, %c0_15, %c0_16] : memref<1x8x128xf32, #tpu.memory_space<vmem>>, vector<1x8x128xf32>
      %38 = vector.shape_cast %32 : vector<8x128xf32> to vector<1x8x128xf32>
      %39 = arith.addf %37, %38 : vector<1x8x128xf32>
      %c0_17 = arith.constant 0 : index
      %c0_18 = arith.constant 0 : index
      %c0_19 = arith.constant 0 : index
      %40 = vector.load %arg4[%c0_17, %c0_18, %c0_19] : memref<1x8x128xf32, #tpu.memory_space<vmem>>, vector<1x8x128xf32>
      tpu.vector_store %arg4[%c0_17, %c0_18, %c0_19], %39 {strides = array<i32>} : memref<1x8x128xf32, #tpu.memory_space<vmem>>, vector<1x8x128xf32>,
      %c0_20 = arith.constant 0 : index
      %c0_21 = arith.constant 0 : index
      %c0_22 = arith.constant 0 : index
      %41 = vector.load %arg5[%c0_20, %c0_21, %c0_22] : memref<1x8x128xf32, #tpu.memory_space<vmem>>, vector<1x8x128xf32>
      %42 = vector.shape_cast %36 : vector<8x128xf32> to vector<1x8x128xf32>
      %43 = arith.addf %41, %42 : vector<1x8x128xf32>
      %c0_23 = arith.constant 0 : index
      %c0_24 = arith.constant 0 : index
      %c0_25 = arith.constant 0 : index
      %44 = vector.load %arg5[%c0_23, %c0_24, %c0_25] : memref<1x8x128xf32, #tpu.memory_space<vmem>>, vector<1x8x128xf32>
      tpu.vector_store %arg5[%c0_23, %c0_24, %c0_25], %43 {strides = array<i32>} : memref<1x8x128xf32, #tpu.memory_space<vmem>>, vector<1x8x128xf32>,
    } else {
    }
    return
  }
  func.func @transform_0(%arg0: i32, %arg1: i32) -> (i32, i32) {
    %c1_i32 = arith.constant 1 : i32
    %0 = arith.muli %arg0, %c1_i32 : i32
    %1 = arith.addi %0, %arg1 : i32
    %c0_i32 = arith.constant 0 : i32
    %2 = arith.minsi %1, %c0_i32 : i32
    %c0_i32_0 = arith.constant 0 : i32
    %c0_i32_1 = arith.constant 0 : i32
    return %2, %c0_i32_0 : i32, i32
  }
  func.func @transform_1(%arg0: i32, %arg1: i32) -> (i32, i32) {
    %c1_i32 = arith.constant 1 : i32
    %0 = arith.muli %arg0, %c1_i32 : i32
    %1 = arith.addi %0, %arg1 : i32
    %c0_i32 = arith.constant 0 : i32
    %2 = arith.minsi %1, %c0_i32 : i32
    %c0_i32_0 = arith.constant 0 : i32
    %c0_i32_1 = arith.constant 0 : i32
    return %2, %c0_i32_0 : i32, i32
  }
  func.func @transform_2(%arg0: i32, %arg1: i32) -> (i32, i32, i32) {
    %c0_i32 = arith.constant 0 : i32
    %c0_i32_0 = arith.constant 0 : i32
    %c0_i32_1 = arith.constant 0 : i32
    return %arg0, %c0_i32, %c0_i32_0 : i32, i32, i32
  }
  func.func @transform_3(%arg0: i32, %arg1: i32) -> (i32, i32, i32) {
    %c0_i32 = arith.constant 0 : i32
    %c0_i32_0 = arith.constant 0 : i32
    %c0_i32_1 = arith.constant 0 : i32
    return %arg0, %c0_i32, %c0_i32_0 : i32, i32, i32
  }
}

</mosaic_0001>

<llo_original>
// kernel: tpu_custom_call.1
$region0: #{tpu_custom_call.1}
  #allocation0 [shape = 'u32[]', space=smem, size = 0x4, offset = 0x4, fixed_abs, tag = 'smem constant byte address 0x4 - core index']
  #allocation1 [shape = 'u32[144,128]{1,0:T(1,128)}', space=vmem, size = 0x12000, scoped, tag = 'internal scratch']
  %s0 = inlined_call_operand.hbm [shape: f32[16,128], index: 0, kind: input, shape index: {}]
  %s1 = inlined_call_operand.hbm [shape: f32[16,128], index: 1, kind: input, shape index: {}]
  %s2 = inlined_call_operand.hbm [shape: f32[1,8,128], index: 2, kind: output, shape index: {0}]
  %s3 = inlined_call_operand.hbm [shape: f32[1,8,128], index: 3, kind: output, shape index: {1}]
  %4 = xla_tuple %s2, %s3
  %s5 = sld [smem:[#allocation0]]
  $region46: #{tpu_custom_call.1} parent=0
    _
  %s7 = ssub.s32 1, %s5
  %s8 = scalar_select 0, %s7, %s5
  $region1: #{tpu_custom_call.1} parent=0
    #allocation2 [shape = 'u8[131072]{0}', space=vmem, size = 0x20000, scoped, tag = 'input window, operand 0, single buffered']
    #allocation3 [shape = 's32[1]{0}', space=sflag, size = 0x4, scoped, tag = 'scoped memory for tpu_custom_call.1']
    #allocation4 [shape = 's32[1]{0}', space=sflag, size = 0x4, scoped, tag = 'scoped memory for tpu_custom_call.1']
    #allocation5 [shape = 'u8[131072]{0}', space=vmem, size = 0x20000, scoped, tag = 'input window, operand 1, single buffered']
    #allocation6 [shape = 's32[1]{0}', space=sflag, size = 0x4, scoped, tag = 'scoped memory for tpu_custom_call.1']
    #allocation7 [shape = 'u8[4096]{0}', space=vmem, size = 0x1000, scoped, tag = 'output window, operand 0, single buffered']
    #allocation8 [shape = 'u8[4096]{0}', space=vmem, size = 0x1000, scoped, tag = 'output window, operand 1, single buffered']
    #allocation9 [shape = 's32[1]{0}', space=sflag, size = 0x4, scoped, tag = 'scoped memory for tpu_custom_call.1']
    %9 = vsyncpa [#allocation3], 0
    %10 = vsyncpa [#allocation6], 0
    %11 = vsyncpa [#allocation4], 0
    %12 = vsyncpa [#allocation9], 0
    // Predicated region
    $region2: #{tpu_custom_call.1} parent=1 // pred_check
      _
    $region3: #{tpu_custom_call.1} parent=1 // pred_check_branch
      %14 = sbr.rel (0) target = $region5
    $region4: #{tpu_custom_call.1} parent=1 // pred_region
      %s15 = sadd.s32 0, 0
      %p16 = scmp.lt.s32.totalorder %s15, 0
      %s17 = scalar_select %p16, %s15, 0
      %s18 = smul.u32 32, %s17
      %s19 = ssub.s32 2, %s18
      %s20 = smul.u32 128, %s19
      %s22 = ssub.s32 4096, %s20
      %23 = vsyncadd [#allocation3], %s22
      %p24 = scmp.ne.s32.totalorder 0, %s20
      %s25 = smul.addr %s18, 128
      %s26 = scalar_lea.hbm %s0, %s25
      %s27 = smul.u32 8, %s19
      %s28 = sshll.u32 [#allocation2], 4
      %s29 = int_to_ptr.vmem [resolvable:$true] %s28
      %s30 = sshll.u32 %s27, 4
      %34 = dma.hbm_to_vmem [thread:$0]  (%p24), %s26, %s30, %s29, [#allocation3], 128, 128, 8
    $region5: #{tpu_custom_call.1} parent=1 // pred_fallthru
      _
    // Predicated region
    $region6: #{tpu_custom_call.1} parent=1 // pred_check
      _
    $region7: #{tpu_custom_call.1} parent=1 // pred_check_branch
      %36 = sbr.rel (0) target = $region9
    $region8: #{tpu_custom_call.1} parent=1 // pred_region
      %s37 = sadd.s32 0, 0
      %p38 = scmp.lt.s32.totalorder %s37, 0
      %s39 = scalar_select %p38, %s37, 0
      %s40 = smul.u32 32, %s39
      %s41 = ssub.s32 2, %s40
      %s42 = smul.u32 128, %s41
      %s44 = ssub.s32 4096, %s42
      %45 = vsyncadd [#allocation6], %s44
      %p46 = scmp.ne.s32.totalorder 0, %s42
      %s47 = smul.addr %s40, 128
      %s48 = scalar_lea.hbm %s1, %s47
      %s49 = smul.u32 8, %s41
      %s50 = sshll.u32 [#allocation5], 4
      %s51 = int_to_ptr.vmem [resolvable:$true] %s50
      %s52 = sshll.u32 %s49, 4
      %56 = dma.hbm_to_vmem [thread:$0]  (%p46), %s48, %s52, %s51, [#allocation6], 128, 128, 8
    $region9: #{tpu_custom_call.1} parent=1 // pred_fallthru
      _
    // Predicated region
    $region10: #{tpu_custom_call.1} parent=1 // pred_check
      _
    $region11: #{tpu_custom_call.1} parent=1 // pred_check_branch
      %58 = sbr.rel (0) target = $region13
    $region12: #{tpu_custom_call.1} parent=1 // pred_region
      %59 = dma.done [#allocation3], 4096
    $region13: #{tpu_custom_call.1} parent=1 // pred_fallthru
      _
    // Predicated region
    $region14: #{tpu_custom_call.1} parent=1 // pred_check
      _
    $region15: #{tpu_custom_call.1} parent=1 // pred_check_branch
      %61 = sbr.rel (0) target = $region17
    $region16: #{tpu_custom_call.1} parent=1 // pred_region
      %62 = dma.done [#allocation6], 4096
    $region17: #{tpu_custom_call.1} parent=1 // pred_fallthru
      _
    %s63 = sadd.s32 0, 0
    %p64 = scmp.lt.s32.totalorder %s63, 0
    %s65 = scalar_select %p64, %s63, 0
    %s66 = smul.u32 32, %s65
    %s67 = ssub.s32 2, %s66
    %s68 = smul.u32 128, %s67
    %s69 = sadd.s32 0, 0
    %p70 = scmp.lt.s32.totalorder %s69, 0
    %s71 = scalar_select %p70, %s69, 0
    %s72 = smul.u32 32, %s71
    %s73 = ssub.s32 2, %s72
    %s74 = smul.u32 128, %s73
    %p75 = scmp.eq.s32.totalorder 0, 0
    // Predicated region
    $region18: #{tpu_custom_call.1} parent=1 // pred_check
      %p76 = pneg %p75
    $region19: #{tpu_custom_call.1} parent=1 // pred_check_branch
      %78 = sbr.rel (%p76) target = $region21
    $region20: #{tpu_custom_call.1} parent=1 // pred_region
      %79 = vst [vmem:[#allocation7] sm:$0xff] 0.0
      %80 = vst [vmem:[#allocation8] sm:$0xff] 0.0
    $region21: #{tpu_custom_call.1} parent=1 // pred_fallthru
      _
    %s81 = sadd.s32 0, 0
    %s82 = smul.u32 %s81, 256
    %s83 = ssub.s32 16, %s82
    %p84 = scmp.ge.s32.totalorder %s83, 256
    // Predicated region
    $region22: #{tpu_custom_call.1} parent=1 // pred_check
      %p85 = pneg %p84
    $region23: #{tpu_custom_call.1} parent=1 // pred_check_branch
      %87 = sbr.rel (%p85) target = $region25
    $region24: #{tpu_custom_call.1} parent=1 // pred_region
      %v88 = vld [vmem:[#allocation2] sm:$0xff]
      %v89 = vld [vmem:[#allocation2 + $0x8] sm:$0xff]
      %v90 = vld [vmem:[#allocation2 + $0x10] sm:$0xff]
      %v91 = vld [vmem:[#allocation2 + $0x18] sm:$0xff]
      %v92 = vld [vmem:[#allocation2 + $0x20] sm:$0xff]
      %v93 = vld [vmem:[#allocation2 + $0x28] sm:$0xff]
      %v94 = vld [vmem:[#allocation2 + $0x30] sm:$0xff]
      %v95 = vld [vmem:[#allocation2 + $0x38] sm:$0xff]
      %v96 = vld [vmem:[#allocation2 + $0x40] sm:$0xff]
      %v97 = vld [vmem:[#allocation2 + $0x48] sm:$0xff]
      %v98 = vld [vmem:[#allocation2 + $0x50] sm:$0xff]
      %v99 = vld [vmem:[#allocation2 + $0x58] sm:$0xff]
      %v100 = vld [vmem:[#allocation2 + $0x60] sm:$0xff]
      %v101 = vld [vmem:[#allocation2 + $0x68] sm:$0xff]
      %v102 = vld [vmem:[#allocation2 + $0x70] sm:$0xff]
      %v103 = vld [vmem:[#allocation2 + $0x78] sm:$0xff]
      %v104 = vld [vmem:[#allocation2 + $0x80] sm:$0xff]
      %v105 = vld [vmem:[#allocation2 + $0x88] sm:$0xff]
      %v106 = vld [vmem:[#allocation2 + $0x90] sm:$0xff]
      %v107 = vld [vmem:[#allocation2 + $0x98] sm:$0xff]
      %v108 = vld [vmem:[#allocation2 + $0xa0] sm:$0xff]
      %v109 = vld [vmem:[#allocation2 + $0xa8] sm:$0xff]
      %v110 = vld [vmem:[#allocation2 + $0xb0] sm:$0xff]
      %v111 = vld [vmem:[#allocation2 + $0xb8] sm:$0xff]
      %v112 = vld [vmem:[#allocation2 + $0xc0] sm:$0xff]
      %v113 = vld [vmem:[#allocation2 + $0xc8] sm:$0xff]
      %v114 = vld [vmem:[#allocation2 + $0xd0] sm:$0xff]
      %v115 = vld [vmem:[#allocation2 + $0xd8] sm:$0xff]
      %v116 = vld [vmem:[#allocation2 + $0xe0] sm:$0xff]
      %v117 = vld [vmem:[#allocation2 + $0xe8] sm:$0xff]
      %v118 = vld [vmem:[#allocation2 + $0xf0] sm:$0xff]
      %v119 = vld [vmem:[#allocation2 + $0xf8] sm:$0xff]
      %v120 = vld [vmem:[#allocation5] sm:$0xff]
      %v121 = vld [vmem:[#allocation5 + $0x8] sm:$0xff]
      %v122 = vld [vmem:[#allocation5 + $0x10] sm:$0xff]
      %v123 = vld [vmem:[#allocation5 + $0x18] sm:$0xff]
      %v124 = vld [vmem:[#allocation5 + $0x20] sm:$0xff]
      %v125 = vld [vmem:[#allocation5 + $0x28] sm:$0xff]
      %v126 = vld [vmem:[#allocation5 + $0x30] sm:$0xff]
      %v127 = vld [vmem:[#allocation5 + $0x38] sm:$0xff]
      %v128 = vld [vmem:[#allocation5 + $0x40] sm:$0xff]
      %v129 = vld [vmem:[#allocation5 + $0x48] sm:$0xff]
      %v130 = vld [vmem:[#allocation5 + $0x50] sm:$0xff]
      %v131 = vld [vmem:[#allocation5 + $0x58] sm:$0xff]
      %v132 = vld [vmem:[#allocation5 + $0x60] sm:$0xff]
      %v133 = vld [vmem:[#allocation5 + $0x68] sm:$0xff]
      %v134 = vld [vmem:[#allocation5 + $0x70] sm:$0xff]
      %v135 = vld [vmem:[#allocation5 + $0x78] sm:$0xff]
      %v136 = vld [vmem:[#allocation5 + $0x80] sm:$0xff]
      %v137 = vld [vmem:[#allocation5 + $0x88] sm:$0xff]
      %v138 = vld [vmem:[#allocation5 + $0x90] sm:$0xff]
      %v139 = vld [vmem:[#allocation5 + $0x98] sm:$0xff]
      %v140 = vld [vmem:[#allocation5 + $0xa0] sm:$0xff]
      %v141 = vld [vmem:[#allocation5 + $0xa8] sm:$0xff]
      %v142 = vld [vmem:[#allocation5 + $0xb0] sm:$0xff]
      %v143 = vld [vmem:[#allocation5 + $0xb8] sm:$0xff]
      %v144 = vld [vmem:[#allocation5 + $0xc0] sm:$0xff]
      %v145 = vld [vmem:[#allocation5 + $0xc8] sm:$0xff]
      %v146 = vld [vmem:[#allocation5 + $0xd0] sm:$0xff]
      %v147 = vld [vmem:[#allocation5 + $0xd8] sm:$0xff]
      %v148 = vld [vmem:[#allocation5 + $0xe0] sm:$0xff]
      %v149 = vld [vmem:[#allocation5 + $0xe8] sm:$0xff]
      %v150 = vld [vmem:[#allocation5 + $0xf0] sm:$0xff]
      %v151 = vld [vmem:[#allocation5 + $0xf8] sm:$0xff]
      %v152 = vmul.f32 %v88, %v120
      %v153 = vmul.f32 %v89, %v121
      %v154 = vmul.f32 %v90, %v122
      %v155 = vmul.f32 %v91, %v123
      %v156 = vmul.f32 %v92, %v124
      %v157 = vmul.f32 %v93, %v125
      %v158 = vmul.f32 %v94, %v126
      %v159 = vmul.f32 %v95, %v127
      %v160 = vmul.f32 %v96, %v128
      %v161 = vmul.f32 %v97, %v129
      %v162 = vmul.f32 %v98, %v130
      %v163 = vmul.f32 %v99, %v131
      %v164 = vmul.f32 %v100, %v132
      %v165 = vmul.f32 %v101, %v133
      %v166 = vmul.f32 %v102, %v134
      %v167 = vmul.f32 %v103, %v135
      %v168 = vmul.f32 %v104, %v136
      %v169 = vmul.f32 %v105, %v137
      %v170 = vmul.f32 %v106, %v138
      %v171 = vmul.f32 %v107, %v139
      %v172 = vmul.f32 %v108, %v140
      %v173 = vmul.f32 %v109, %v141
      %v174 = vmul.f32 %v110, %v142
      %v175 = vmul.f32 %v111, %v143
      %v176 = vmul.f32 %v112, %v144
      %v177 = vmul.f32 %v113, %v145
      %v178 = vmul.f32 %v114, %v146
      %v179 = vmul.f32 %v115, %v147
      %v180 = vmul.f32 %v116, %v148
      %v181 = vmul.f32 %v117, %v149
      %v182 = vmul.f32 %v118, %v150
      %v183 = vmul.f32 %v119, %v151
      %v184 = vadd.f32 %v152, %v153
      %v185 = vadd.f32 %v184, %v154
      %v186 = vadd.f32 %v185, %v155
      %v187 = vadd.f32 %v186, %v156
      %v188 = vadd.f32 %v187, %v157
      %v189 = vadd.f32 %v188, %v158
      %v190 = vadd.f32 %v189, %v159
      %v191 = vadd.f32 %v190, %v160
      %v192 = vadd.f32 %v191, %v161
      %v193 = vadd.f32 %v192, %v162
      %v194 = vadd.f32 %v193, %v163
      %v195 = vadd.f32 %v194, %v164
      %v196 = vadd.f32 %v195, %v165
      %v197 = vadd.f32 %v196, %v166
      %v198 = vadd.f32 %v197, %v167
      %v199 = vadd.f32 %v198, %v168
      %v200 = vadd.f32 %v199, %v169
      %v201 = vadd.f32 %v200, %v170
      %v202 = vadd.f32 %v201, %v171
      %v203 = vadd.f32 %v202, %v172
      %v204 = vadd.f32 %v203, %v173
      %v205 = vadd.f32 %v204, %v174
      %v206 = vadd.f32 %v205, %v175
      %v207 = vadd.f32 %v206, %v176
      %v208 = vadd.f32 %v207, %v177
      %v209 = vadd.f32 %v208, %v178
      %v210 = vadd.f32 %v209, %v179
      %v211 = vadd.f32 %v210, %v180
      %v212 = vadd.f32 %v211, %v181
      %v213 = vadd.f32 %v212, %v182
      %v214 = vadd.f32 %v213, %v183
      %v215 = vadd.f32 %v214, 0.0
      %v216 = vadd.f32 %v88, %v120
      %v217 = vadd.f32 %v89, %v121
      %v218 = vadd.f32 %v90, %v122
      %v219 = vadd.f32 %v91, %v123
      %v220 = vadd.f32 %v92, %v124
      %v221 = vadd.f32 %v93, %v125
      %v222 = vadd.f32 %v94, %v126
      %v223 = vadd.f32 %v95, %v127
      %v224 = vadd.f32 %v96, %v128
      %v225 = vadd.f32 %v97, %v129
      %v226 = vadd.f32 %v98, %v130
      %v227 = vadd.f32 %v99, %v131
      %v228 = vadd.f32 %v100, %v132
      %v229 = vadd.f32 %v101, %v133
      %v230 = vadd.f32 %v102, %v134
      %v231 = vadd.f32 %v103, %v135
      %v232 = vadd.f32 %v104, %v136
      %v233 = vadd.f32 %v105, %v137
      %v234 = vadd.f32 %v106, %v138
      %v235 = vadd.f32 %v107, %v139
      %v236 = vadd.f32 %v108, %v140
      %v237 = vadd.f32 %v109, %v141
      %v238 = vadd.f32 %v110, %v142
      %v239 = vadd.f32 %v111, %v143
      %v240 = vadd.f32 %v112, %v144
      %v241 = vadd.f32 %v113, %v145
      %v242 = vadd.f32 %v114, %v146
      %v243 = vadd.f32 %v115, %v147
      %v244 = vadd.f32 %v116, %v148
      %v245 = vadd.f32 %v117, %v149
      %v246 = vadd.f32 %v118, %v150
      %v247 = vadd.f32 %v119, %v151
      %v248 = vadd.f32 %v216, %v217
      %v249 = vadd.f32 %v248, %v218
      %v250 = vadd.f32 %v249, %v219
      %v251 = vadd.f32 %v250, %v220
      %v252 = vadd.f32 %v251, %v221
      %v253 = vadd.f32 %v252, %v222
      %v254 = vadd.f32 %v253, %v223
      %v255 = vadd.f32 %v254, %v224
      %v256 = vadd.f32 %v255, %v225
      %v257 = vadd.f32 %v256, %v226
      %v258 = vadd.f32 %v257, %v227
      %v259 = vadd.f32 %v258, %v228
      %v260 = vadd.f32 %v259, %v229
      %v261 = vadd.f32 %v260, %v230
      %v262 = vadd.f32 %v261, %v231
      %v263 = vadd.f32 %v262, %v232
      %v264 = vadd.f32 %v263, %v233
      %v265 = vadd.f32 %v264, %v234
      %v266 = vadd.f32 %v265, %v235
      %v267 = vadd.f32 %v266, %v236
      %v268 = vadd.f32 %v267, %v237
      %v269 = vadd.f32 %v268, %v238
      %v270 = vadd.f32 %v269, %v239
      %v271 = vadd.f32 %v270, %v240
      %v272 = vadd.f32 %v271, %v241
      %v273 = vadd.f32 %v272, %v242
      %v274 = vadd.f32 %v273, %v243
      %v275 = vadd.f32 %v274, %v244
      %v276 = vadd.f32 %v275, %v245
      %v277 = vadd.f32 %v276, %v246
      %v278 = vadd.f32 %v277, %v247
      %v279 = vadd.f32 %v278, 0.0
      %v280 = vld [vmem:[#allocation7] sm:$0xff]
      %v281 = vadd.f32 %v280, %v215
      %282 = vst [vmem:[#allocation7] sm:$0xff] %v281
      %v283 = vld [vmem:[#allocation8] sm:$0xff]
      %v284 = vadd.f32 %v283, %v279
      %285 = vst [vmem:[#allocation8] sm:$0xff] %v284
    $region25: #{tpu_custom_call.1} parent=1 // pred_fallthru
      _
    %p286 = scmp.lt.s32.totalorder %s83, 256
    // Predicated region
    $region26: #{tpu_custom_call.1} parent=1 // pred_check
      %p287 = pneg %p286
    $region27: #{tpu_custom_call.1} parent=1 // pred_check_branch
      %289 = sbr.rel (%p287) target = $region29
    $region28: #{tpu_custom_call.1} parent=1 // pred_region
      %v290 = vld [vmem:[#allocation2] sm:$0xff]
      %v291 = vld [vmem:[#allocation2 + $0x8] sm:$0xff]
      %v292 = vld [vmem:[#allocation2 + $0x10] sm:$0xff]
      %v293 = vld [vmem:[#allocation2 + $0x18] sm:$0xff]
      %v294 = vld [vmem:[#allocation2 + $0x20] sm:$0xff]
      %v295 = vld [vmem:[#allocation2 + $0x28] sm:$0xff]
      %v296 = vld [vmem:[#allocation2 + $0x30] sm:$0xff]
      %v297 = vld [vmem:[#allocation2 + $0x38] sm:$0xff]
      %v298 = vld [vmem:[#allocation2 + $0x40] sm:$0xff]
      %v299 = vld [vmem:[#allocation2 + $0x48] sm:$0xff]
      %v300 = vld [vmem:[#allocation2 + $0x50] sm:$0xff]
      %v301 = vld [vmem:[#allocation2 + $0x58] sm:$0xff]
      %v302 = vld [vmem:[#allocation2 + $0x60] sm:$0xff]
      %v303 = vld [vmem:[#allocation2 + $0x68] sm:$0xff]
      %v304 = vld [vmem:[#allocation2 + $0x70] sm:$0xff]
      %v305 = vld [vmem:[#allocation2 + $0x78] sm:$0xff]
      %v306 = vld [vmem:[#allocation2 + $0x80] sm:$0xff]
      %v307 = vld [vmem:[#allocation2 + $0x88] sm:$0xff]
      %v308 = vld [vmem:[#allocation2 + $0x90] sm:$0xff]
      %v309 = vld [vmem:[#allocation2 + $0x98] sm:$0xff]
      %v310 = vld [vmem:[#allocation2 + $0xa0] sm:$0xff]
      %v311 = vld [vmem:[#allocation2 + $0xa8] sm:$0xff]
      %v312 = vld [vmem:[#allocation2 + $0xb0] sm:$0xff]
      %v313 = vld [vmem:[#allocation2 + $0xb8] sm:$0xff]
      %v314 = vld [vmem:[#allocation2 + $0xc0] sm:$0xff]
      %v315 = vld [vmem:[#allocation2 + $0xc8] sm:$0xff]
      %v316 = vld [vmem:[#allocation2 + $0xd0] sm:$0xff]
      %v317 = vld [vmem:[#allocation2 + $0xd8] sm:$0xff]
      %v318 = vld [vmem:[#allocation2 + $0xe0] sm:$0xff]
      %v319 = vld [vmem:[#allocation2 + $0xe8] sm:$0xff]
      %v320 = vld [vmem:[#allocation2 + $0xf0] sm:$0xff]
      %v321 = vld [vmem:[#allocation2 + $0xf8] sm:$0xff]
      %v322 = vld [vmem:[#allocation5] sm:$0xff]
      %v323 = vld [vmem:[#allocation5 + $0x8] sm:$0xff]
      %v324 = vld [vmem:[#allocation5 + $0x10] sm:$0xff]
      %v325 = vld [vmem:[#allocation5 + $0x18] sm:$0xff]
      %v326 = vld [vmem:[#allocation5 + $0x20] sm:$0xff]
      %v327 = vld [vmem:[#allocation5 + $0x28] sm:$0xff]
      %v328 = vld [vmem:[#allocation5 + $0x30] sm:$0xff]
      %v329 = vld [vmem:[#allocation5 + $0x38] sm:$0xff]
      %v330 = vld [vmem:[#allocation5 + $0x40] sm:$0xff]
      %v331 = vld [vmem:[#allocation5 + $0x48] sm:$0xff]
      %v332 = vld [vmem:[#allocation5 + $0x50] sm:$0xff]
      %v333 = vld [vmem:[#allocation5 + $0x58] sm:$0xff]
      %v334 = vld [vmem:[#allocation5 + $0x60] sm:$0xff]
      %v335 = vld [vmem:[#allocation5 + $0x68] sm:$0xff]
      %v336 = vld [vmem:[#allocation5 + $0x70] sm:$0xff]
      %v337 = vld [vmem:[#allocation5 + $0x78] sm:$0xff]
      %v338 = vld [vmem:[#allocation5 + $0x80] sm:$0xff]
      %v339 = vld [vmem:[#allocation5 + $0x88] sm:$0xff]
      %v340 = vld [vmem:[#allocation5 + $0x90] sm:$0xff]
      %v341 = vld [vmem:[#allocation5 + $0x98] sm:$0xff]
      %v342 = vld [vmem:[#allocation5 + $0xa0] sm:$0xff]
      %v343 = vld [vmem:[#allocation5 + $0xa8] sm:$0xff]
      %v344 = vld [vmem:[#allocation5 + $0xb0] sm:$0xff]
      %v345 = vld [vmem:[#allocation5 + $0xb8] sm:$0xff]
      %v346 = vld [vmem:[#allocation5 + $0xc0] sm:$0xff]
      %v347 = vld [vmem:[#allocation5 + $0xc8] sm:$0xff]
      %v348 = vld [vmem:[#allocation5 + $0xd0] sm:$0xff]
      %v349 = vld [vmem:[#allocation5 + $0xd8] sm:$0xff]
      %v350 = vld [vmem:[#allocation5 + $0xe0] sm:$0xff]
      %v351 = vld [vmem:[#allocation5 + $0xe8] sm:$0xff]
      %v352 = vld [vmem:[#allocation5 + $0xf0] sm:$0xff]
      %v353 = vld [vmem:[#allocation5 + $0xf8] sm:$0xff]
      %v354 = vlaneseq
      %v355 = vshrl.u32 %v354, 7
      %v356 = vadd.s32 %v355, 8
      %v357 = vadd.s32 %v355, 16
      %v358 = vadd.s32 %v355, 24
      %v359 = vadd.s32 %v355, 32
      %v360 = vadd.s32 %v355, 40
      %v361 = vadd.s32 %v355, 48
      %v362 = vadd.s32 %v355, 56
      %v363 = vadd.s32 %v355, 64
      %v364 = vadd.s32 %v355, 72
      %v365 = vadd.s32 %v355, 80
      %v366 = vadd.s32 %v355, 88
      %v367 = vadd.s32 %v355, 96
      %v368 = vadd.s32 %v355, 104
      %v369 = vadd.s32 %v355, 112
      %v370 = vadd.s32 %v355, 120
      %v371 = vadd.s32 %v355, 128
      %v372 = vadd.s32 %v355, 136
      %v373 = vadd.s32 %v355, 144
      %v374 = vadd.s32 %v355, 152
      %v375 = vadd.s32 %v355, 160
      %v376 = vadd.s32 %v355, 168
      %v377 = vadd.s32 %v355, 176
      %v378 = vadd.s32 %v355, 184
      %v379 = vadd.s32 %v355, 192
      %v380 = vadd.s32 %v355, 200
      %v381 = vadd.s32 %v355, 208
      %v382 = vadd.s32 %v355, 216
      %v383 = vadd.s32 %v355, 224
      %v384 = vadd.s32 %v355, 232
      %v385 = vadd.s32 %v355, 240
      %v386 = vadd.s32 %v355, 248
      %v387 = vstv %s83
      %vm388 = vcmp.lt.s32.totalorder %v355, %v387
      %vm389 = vcmp.lt.s32.totalorder %v356, %v387
      %vm390 = vcmp.lt.s32.totalorder %v357, %v387
      %vm391 = vcmp.lt.s32.totalorder %v358, %v387
      %vm392 = vcmp.lt.s32.totalorder %v359, %v387
      %vm393 = vcmp.lt.s32.totalorder %v360, %v387
      %vm394 = vcmp.lt.s32.totalorder %v361, %v387
      %vm395 = vcmp.lt.s32.totalorder %v362, %v387
      %vm396 = vcmp.lt.s32.totalorder %v363, %v387
      %vm397 = vcmp.lt.s32.totalorder %v364, %v387
      %vm398 = vcmp.lt.s32.totalorder %v365, %v387
      %vm399 = vcmp.lt.s32.totalorder %v366, %v387
      %vm400 = vcmp.lt.s32.totalorder %v367, %v387
      %vm401 = vcmp.lt.s32.totalorder %v368, %v387
      %vm402 = vcmp.lt.s32.totalorder %v369, %v387
      %vm403 = vcmp.lt.s32.totalorder %v370, %v387
      %vm404 = vcmp.lt.s32.totalorder %v371, %v387
      %vm405 = vcmp.lt.s32.totalorder %v372, %v387
      %vm406 = vcmp.lt.s32.totalorder %v373, %v387
      %vm407 = vcmp.lt.s32.totalorder %v374, %v387
      %vm408 = vcmp.lt.s32.totalorder %v375, %v387
      %vm409 = vcmp.lt.s32.totalorder %v376, %v387
      %vm410 = vcmp.lt.s32.totalorder %v377, %v387
      %vm411 = vcmp.lt.s32.totalorder %v378, %v387
      %vm412 = vcmp.lt.s32.totalorder %v379, %v387
      %vm413 = vcmp.lt.s32.totalorder %v380, %v387
      %vm414 = vcmp.lt.s32.totalorder %v381, %v387
      %vm415 = vcmp.lt.s32.totalorder %v382, %v387
      %vm416 = vcmp.lt.s32.totalorder %v383, %v387
      %vm417 = vcmp.lt.s32.totalorder %v384, %v387
      %vm418 = vcmp.lt.s32.totalorder %v385, %v387
      %vm419 = vcmp.lt.s32.totalorder %v386, %v387
      %v420 = vsel %vm388, %v290, 0.0
      %v421 = vsel %vm389, %v291, 0.0
      %v422 = vsel %vm390, %v292, 0.0
      %v423 = vsel %vm391, %v293, 0.0
      %v424 = vsel %vm392, %v294, 0.0
      %v425 = vsel %vm393, %v295, 0.0
      %v426 = vsel %vm394, %v296, 0.0
      %v427 = vsel %vm395, %v297, 0.0
      %v428 = vsel %vm396, %v298, 0.0
      %v429 = vsel %vm397, %v299, 0.0
      %v430 = vsel %vm398, %v300, 0.0
      %v431 = vsel %vm399, %v301, 0.0
      %v432 = vsel %vm400, %v302, 0.0
      %v433 = vsel %vm401, %v303, 0.0
      %v434 = vsel %vm402, %v304, 0.0
      %v435 = vsel %vm403, %v305, 0.0
      %v436 = vsel %vm404, %v306, 0.0
      %v437 = vsel %vm405, %v307, 0.0
      %v438 = vsel %vm406, %v308, 0.0
      %v439 = vsel %vm407, %v309, 0.0
      %v440 = vsel %vm408, %v310, 0.0
      %v441 = vsel %vm409, %v311, 0.0
      %v442 = vsel %vm410, %v312, 0.0
      %v443 = vsel %vm411, %v313, 0.0
      %v444 = vsel %vm412, %v314, 0.0
      %v445 = vsel %vm413, %v315, 0.0
      %v446 = vsel %vm414, %v316, 0.0
      %v447 = vsel %vm415, %v317, 0.0
      %v448 = vsel %vm416, %v318, 0.0
      %v449 = vsel %vm417, %v319, 0.0
      %v450 = vsel %vm418, %v320, 0.0
      %v451 = vsel %vm419, %v321, 0.0
      %v452 = vsel %vm388, %v322, 0.0
      %v453 = vsel %vm389, %v323, 0.0
      %v454 = vsel %vm390, %v324, 0.0
      %v455 = vsel %vm391, %v325, 0.0
      %v456 = vsel %vm392, %v326, 0.0
      %v457 = vsel %vm393, %v327, 0.0
      %v458 = vsel %vm394, %v328, 0.0
      %v459 = vsel %vm395, %v329, 0.0
      %v460 = vsel %vm396, %v330, 0.0
      %v461 = vsel %vm397, %v331, 0.0
      %v462 = vsel %vm398, %v332, 0.0
      %v463 = vsel %vm399, %v333, 0.0
      %v464 = vsel %vm400, %v334, 0.0
      %v465 = vsel %vm401, %v335, 0.0
      %v466 = vsel %vm402, %v336, 0.0
      %v467 = vsel %vm403, %v337, 0.0
      %v468 = vsel %vm404, %v338, 0.0
      %v469 = vsel %vm405, %v339, 0.0
      %v470 = vsel %vm406, %v340, 0.0
      %v471 = vsel %vm407, %v341, 0.0
      %v472 = vsel %vm408, %v342, 0.0
      %v473 = vsel %vm409, %v343, 0.0
      %v474 = vsel %vm410, %v344, 0.0
      %v475 = vsel %vm411, %v345, 0.0
      %v476 = vsel %vm412, %v346, 0.0
      %v477 = vsel %vm413, %v347, 0.0
      %v478 = vsel %vm414, %v348, 0.0
      %v479 = vsel %vm415, %v349, 0.0
      %v480 = vsel %vm416, %v350, 0.0
      %v481 = vsel %vm417, %v351, 0.0
      %v482 = vsel %vm418, %v352, 0.0
      %v483 = vsel %vm419, %v353, 0.0
      %v484 = vmul.f32 %v420, %v452
      %v485 = vmul.f32 %v421, %v453
      %v486 = vmul.f32 %v422, %v454
      %v487 = vmul.f32 %v423, %v455
      %v488 = vmul.f32 %v424, %v456
      %v489 = vmul.f32 %v425, %v457
      %v490 = vmul.f32 %v426, %v458
      %v491 = vmul.f32 %v427, %v459
      %v492 = vmul.f32 %v428, %v460
      %v493 = vmul.f32 %v429, %v461
      %v494 = vmul.f32 %v430, %v462
      %v495 = vmul.f32 %v431, %v463
      %v496 = vmul.f32 %v432, %v464
      %v497 = vmul.f32 %v433, %v465
      %v498 = vmul.f32 %v434, %v466
      %v499 = vmul.f32 %v435, %v467
      %v500 = vmul.f32 %v436, %v468
      %v501 = vmul.f32 %v437, %v469
      %v502 = vmul.f32 %v438, %v470
      %v503 = vmul.f32 %v439, %v471
      %v504 = vmul.f32 %v440, %v472
      %v505 = vmul.f32 %v441, %v473
      %v506 = vmul.f32 %v442, %v474
      %v507 = vmul.f32 %v443, %v475
      %v508 = vmul.f32 %v444, %v476
      %v509 = vmul.f32 %v445, %v477
      %v510 = vmul.f32 %v446, %v478
      %v511 = vmul.f32 %v447, %v479
      %v512 = vmul.f32 %v448, %v480
      %v513 = vmul.f32 %v449, %v481
      %v514 = vmul.f32 %v450, %v482
      %v515 = vmul.f32 %v451, %v483
      %v516 = vadd.f32 %v484, %v485
      %v517 = vadd.f32 %v516, %v486
      %v518 = vadd.f32 %v517, %v487
      %v519 = vadd.f32 %v518, %v488
      %v520 = vadd.f32 %v519, %v489
      %v521 = vadd.f32 %v520, %v490
      %v522 = vadd.f32 %v521, %v491
      %v523 = vadd.f32 %v522, %v492
      %v524 = vadd.f32 %v523, %v493
      %v525 = vadd.f32 %v524, %v494
      %v526 = vadd.f32 %v525, %v495
      %v527 = vadd.f32 %v526, %v496
      %v528 = vadd.f32 %v527, %v497
      %v529 = vadd.f32 %v528, %v498
      %v530 = vadd.f32 %v529, %v499
      %v531 = vadd.f32 %v530, %v500
      %v532 = vadd.f32 %v531, %v501
      %v533 = vadd.f32 %v532, %v502
      %v534 = vadd.f32 %v533, %v503
      %v535 = vadd.f32 %v534, %v504
      %v536 = vadd.f32 %v535, %v505
      %v537 = vadd.f32 %v536, %v506
      %v538 = vadd.f32 %v537, %v507
      %v539 = vadd.f32 %v538, %v508
      %v540 = vadd.f32 %v539, %v509
      %v541 = vadd.f32 %v540, %v510
      %v542 = vadd.f32 %v541, %v511
      %v543 = vadd.f32 %v542, %v512
      %v544 = vadd.f32 %v543, %v513
      %v545 = vadd.f32 %v544, %v514
      %v546 = vadd.f32 %v545, %v515
      %v547 = vadd.f32 %v546, 0.0
      %v548 = vadd.f32 %v420, %v452
      %v549 = vadd.f32 %v421, %v453
      %v550 = vadd.f32 %v422, %v454
      %v551 = vadd.f32 %v423, %v455
      %v552 = vadd.f32 %v424, %v456
      %v553 = vadd.f32 %v425, %v457
      %v554 = vadd.f32 %v426, %v458
      %v555 = vadd.f32 %v427, %v459
      %v556 = vadd.f32 %v428, %v460
      %v557 = vadd.f32 %v429, %v461
      %v558 = vadd.f32 %v430, %v462
      %v559 = vadd.f32 %v431, %v463
      %v560 = vadd.f32 %v432, %v464
      %v561 = vadd.f32 %v433, %v465
      %v562 = vadd.f32 %v434, %v466
      %v563 = vadd.f32 %v435, %v467
      %v564 = vadd.f32 %v436, %v468
      %v565 = vadd.f32 %v437, %v469
      %v566 = vadd.f32 %v438, %v470
      %v567 = vadd.f32 %v439, %v471
      %v568 = vadd.f32 %v440, %v472
      %v569 = vadd.f32 %v441, %v473
      %v570 = vadd.f32 %v442, %v474
      %v571 = vadd.f32 %v443, %v475
      %v572 = vadd.f32 %v444, %v476
      %v573 = vadd.f32 %v445, %v477
      %v574 = vadd.f32 %v446, %v478
      %v575 = vadd.f32 %v447, %v479
      %v576 = vadd.f32 %v448, %v480
      %v577 = vadd.f32 %v449, %v481
      %v578 = vadd.f32 %v450, %v482
      %v579 = vadd.f32 %v451, %v483
      %v580 = vadd.f32 %v548, %v549
      %v581 = vadd.f32 %v580, %v550
      %v582 = vadd.f32 %v581, %v551
      %v583 = vadd.f32 %v582, %v552
      %v584 = vadd.f32 %v583, %v553
      %v585 = vadd.f32 %v584, %v554
      %v586 = vadd.f32 %v585, %v555
      %v587 = vadd.f32 %v586, %v556
      %v588 = vadd.f32 %v587, %v557
      %v589 = vadd.f32 %v588, %v558
      %v590 = vadd.f32 %v589, %v559
      %v591 = vadd.f32 %v590, %v560
      %v592 = vadd.f32 %v591, %v561
      %v593 = vadd.f32 %v592, %v562
      %v594 = vadd.f32 %v593, %v563
      %v595 = vadd.f32 %v594, %v564
      %v596 = vadd.f32 %v595, %v565
      %v597 = vadd.f32 %v596, %v566
      %v598 = vadd.f32 %v597, %v567
      %v599 = vadd.f32 %v598, %v568
      %v600 = vadd.f32 %v599, %v569
      %v601 = vadd.f32 %v600, %v570
      %v602 = vadd.f32 %v601, %v571
      %v603 = vadd.f32 %v602, %v572
      %v604 = vadd.f32 %v603, %v573
      %v605 = vadd.f32 %v604, %v574
      %v606 = vadd.f32 %v605, %v575
      %v607 = vadd.f32 %v606, %v576
      %v608 = vadd.f32 %v607, %v577
      %v609 = vadd.f32 %v608, %v578
      %v610 = vadd.f32 %v609, %v579
      %v611 = vadd.f32 %v610, 0.0
      %v612 = vld [vmem:[#allocation7] sm:$0xff]
      %v613 = vadd.f32 %v612, %v547
      %614 = vst [vmem:[#allocation7] sm:$0xff] %v613
      %v615 = vld [vmem:[#allocation8] sm:$0xff]
      %v616 = vadd.f32 %v615, %v611
      %617 = vst [vmem:[#allocation8] sm:$0xff] %v616
    $region29: #{tpu_custom_call.1} parent=1 // pred_fallthru
      _
    // Predicated region
    $region30: #{tpu_custom_call.1} parent=1 // pred_check
      _
    $region31: #{tpu_custom_call.1} parent=1 // pred_check_branch
      %619 = sbr.rel (0) target = $region33
    $region32: #{tpu_custom_call.1} parent=1 // pred_region
      %s621 = ssub.s32 128, 128
      %622 = vsyncadd [#allocation4], %s621
      %s624 = sshll.u32 [#allocation7], 4
      %s625 = int_to_ptr.vmem [resolvable:$true] %s624
      %627 = dma.vmem_to_hbm [thread:$0]  %s625, 128, %s2, [#allocation4]
    $region33: #{tpu_custom_call.1} parent=1 // pred_fallthru
      _
    // Predicated region
    $region34: #{tpu_custom_call.1} parent=1 // pred_check
      _
    $region35: #{tpu_custom_call.1} parent=1 // pred_check_branch
      %629 = sbr.rel (0) target = $region37
    $region36: #{tpu_custom_call.1} parent=1 // pred_region
      %s631 = ssub.s32 128, 128
      %632 = vsyncadd [#allocation9], %s631
      %s634 = sshll.u32 [#allocation8], 4
      %s635 = int_to_ptr.vmem [resolvable:$true] %s634
      %637 = dma.vmem_to_hbm [thread:$0]  %s635, 128, %s3, [#allocation9]
    $region37: #{tpu_custom_call.1} parent=1 // pred_fallthru
      _
    // Predicated region
    $region38: #{tpu_custom_call.1} parent=1 // pred_check
      _
    $region39: #{tpu_custom_call.1} parent=1 // pred_check_branch
      %639 = sbr.rel (0) target = $region41
    $region40: #{tpu_custom_call.1} parent=1 // pred_region
      %640 = dma.done [#allocation4], 128
    $region41: #{tpu_custom_call.1} parent=1 // pred_fallthru
      _
    // Predicated region
    $region42: #{tpu_custom_call.1} parent=1 // pred_check
      _
    $region43: #{tpu_custom_call.1} parent=1 // pred_check_branch
      %642 = sbr.rel (0) target = $region45
    $region44: #{tpu_custom_call.1} parent=1 // pred_region
      %643 = dma.done [#allocation9], 128
    $region45: #{tpu_custom_call.1} parent=1 // pred_fallthru
      _
    %644 = vsyncpa [#allocation3], 1
    %645 = vsyncpa [#allocation6], 1
    %646 = vsyncpa [#allocation4], 1
    %647 = vsyncpa [#allocation9], 1

</llo_original>
